<compile_context>
chip_gen: v5e
topology: v5e:2x2
jax: 0.10.0
libtpu: 0.0.40
codegen_flags: <defaults>
</compile_context>

<pallas_src>
import jax
import jax.numpy as jnp
from jax.experimental import pallas as pl
from jax.experimental.pallas import tpu as pltpu


def _round_up(x, m):
    return -(-x // m) * m


def _outconv_kernel(x_ref, w_ref, b_ref, o_ref):
    """1x1 conv over one batch element's spatial tile.

    x_ref : (Cin,  TS)   activations, channels on sublanes, spatial on lanes
    w_ref : (Cout, Cin)  conv weight (resident across the whole grid)
    b_ref : (Cout, 1)    conv bias
    o_ref : (Cout, TS)   output tile (TS multiple of 128 -> unmasked lane-dense stores)
    """
    y = jnp.dot(
        w_ref[...].astype(jnp.float32),
        x_ref[...].astype(jnp.float32),
        preferred_element_type=jnp.float32,
    )
    o_ref[...] = (y + b_ref[...].astype(jnp.float32)).astype(o_ref.dtype)


def _choose_spatial_tile(hw, cin, cout, n, *, vmem_tile_budget=24 << 20):
    """Lane-dense spatial tile sized by a VMEM byte budget.

    Double-buffered f32 footprint of the in+out tiles (with sublane padding) is
      ~ 2 * (cin_pad + cout_pad) * ts * 4 bytes   <=  vmem_tile_budget.
    Additionally keep >= ~8 total grid steps (pipelining depth + v7x megacore
    balance) when the spatial extent allows it.
    """
    cin_pad = max(8, _round_up(cin, 8))
    cout_pad = max(8, _round_up(cout, 8))

    # Byte-budget cap (multi-MB activation tiles amortize the ~0.35 us/step overhead).
    ts_budget = vmem_tile_budget // (8 * (cin_pad + cout_pad))
    ts = max(128, (ts_budget // 128) * 128)

    # Keep enough grid steps for double-buffering / two-TC sharding.
    want_spatial_steps = max(1, -(-8 // max(n, 1)))
    ts_steps = max(128, _round_up(-(-hw // want_spatial_steps), 128))
    ts = min(ts, ts_steps)

    # Never larger than the (128-rounded) spatial extent itself.
    ts = min(ts, _round_up(hw, 128))
    return ts, cin_pad, cout_pad


def outconv_forward(x_nchw, params):
    """Matches outconv.forward: a single Conv2d(in_ch, out_ch, k=1, s=1, p=0). NCHW in/out."""
    w = params["w"]                      # (Cout, Cin)
    b = params["b"]                      # (Cout,)
    N, Cin, H, W = x_nchw.shape
    Cout = w.shape[0]
    HW = H * W

    ts, cin_pad, cout_pad = _choose_spatial_tile(HW, Cin, Cout, N)
    n_spatial = pl.cdiv(HW, ts)          # tail block (if any) is masked by Pallas

    x2 = x_nchw.reshape(N, Cin, HW)      # contiguous reshape: metadata only, no HBM pass
    b2 = b.reshape(Cout, 1)
    out_dtype = x_nchw.dtype             # bf16 in -> bf16 out; accumulation stays f32

    # VMEM request: double-buffered in/out tiles + resident weights, modest headroom.
    itemsize = jnp.dtype(out_dtype).itemsize
    tile_bytes = 2 * (cin_pad + cout_pad) * ts * max(itemsize, 4)
    vmem_limit = int(min(max(tile_bytes + (4 << 20), 16 << 20), 40 << 20))

    cost = pl.CostEstimate(
        flops=2 * N * Cout * Cin * HW,
        bytes_accessed=itemsize * (N * Cin * HW + N * Cout * HW) + 4 * (Cout * Cin + Cout),
        transcendentals=0,
    )

    out = pl.pallas_call(
        _outconv_kernel,
        out_shape=jax.ShapeDtypeStruct((N, Cout, HW), out_dtype),
        grid_spec=pltpu.PrefetchScalarGridSpec(
            num_scalar_prefetch=0,
            grid=(N, n_spatial),
            in_specs=[
                # activations: one batch element, one lane-dense spatial tile
                pl.BlockSpec((None, Cin, ts), lambda n, s: (n, 0, s)),
                # weight / bias: same block every grid point (stay resident in VMEM)
                pl.BlockSpec((Cout, Cin), lambda n, s: (0, 0)),
                pl.BlockSpec((Cout, 1), lambda n, s: (0, 0)),
            ],
            out_specs=pl.BlockSpec((None, Cout, ts), lambda n, s: (n, 0, s)),
        ),
        compiler_params=pltpu.CompilerParams(
            dimension_semantics=("parallel", "parallel"),
            vmem_limit_bytes=vmem_limit,
        ),
        cost_estimate=cost,
    )(x2, w, b2)

    return out.reshape(N, Cout, H, W)


def make_outconv_params(key, in_ch, out_ch):
    """Synthetic params matching nn.Conv2d(in_ch, out_ch, 1) shapes/init range."""
    k1, k2 = jax.random.split(key)
    bound = 1.0 / (in_ch ** 0.5)
    # PyTorch stores the 1x1 weight as (out_ch, in_ch, 1, 1); we keep it as (out_ch, in_ch).
    w = jax.random.uniform(k1, (out_ch, in_ch), jnp.float32, -bound, bound)
    b = jax.random.uniform(k2, (out_ch,), jnp.float32, -bound, bound)
    return dict(w=w, b=b)


if __name__ == "__main__":
    key = jax.random.PRNGKey(0)
    kx, kp = jax.random.split(key)

    N, in_ch, out_ch, H, W = 2, 4, 8, 16, 16
    x = jax.random.normal(kx, (N, in_ch, H, W), jnp.float32)
    params = make_outconv_params(kp, in_ch, out_ch)

    fwd = jax.jit(outconv_forward)
    y = fwd(x, params)
    jax.block_until_ready(y)

    # Reference check against plain-JAX 1x1 conv.
    ref = jnp.einsum("oc,nchw->nohw", params["w"], x) + params["b"][None, :, None, None]
    assert y.shape == (N, out_ch, H, W), y.shape
    assert jnp.all(jnp.isfinite(y))
    assert jnp.allclose(y, ref, atol=1e-5, rtol=1e-5), float(jnp.max(jnp.abs(y - ref)))

    # Second check with a spatial extent that is NOT a multiple of 128 (masked tail block)
    # and a batch of 1, to exercise the cdiv grid path.
    x2 = jax.random.normal(jax.random.PRNGKey(1), (1, in_ch, 18, 21), jnp.float32)
    y2 = jax.jit(outconv_forward)(x2, params)
    jax.block_until_ready(y2)
    ref2 = jnp.einsum("oc,nchw->nohw", params["w"], x2) + params["b"][None, :, None, None]
    assert jnp.allclose(y2, ref2, atol=1e-5, rtol=1e-5), float(jnp.max(jnp.abs(y2 - ref2)))

    print("KERNEL_OK")
</pallas_src>

<mosaic_0001>
module attributes {stable_mosaic.version = 11 : i64} {
  func.func @_outconv_kernel(%arg0: i32, %arg1: i32, %arg2: memref<1x4x128xf32, #tpu.memory_space<vmem>>, %arg3: memref<8x4xf32, #tpu.memory_space<vmem>>, %arg4: memref<8x1xf32, #tpu.memory_space<vmem>>, %arg5: memref<1x8x128xf32, #tpu.memory_space<vmem>>) attributes {dimension_semantics = [#tpu.dimension_semantics<parallel>, #tpu.dimension_semantics<parallel>], iteration_bounds = array<i64: 2, 2>, scalar_prefetch = 0 : i64, scratch_operands = 0 : i64, tpu.core_type = #tpu.core_type<tc>, window_params = [{transform_indices = @transform_0, window_bounds = array<i64: 1, 4, 128>}, {pipeline_mode = #tpu.pipeline_mode<synchronous>, transform_indices = @transform_1, window_bounds = array<i64: 8, 4>}, {pipeline_mode = #tpu.pipeline_mode<synchronous>, transform_indices = @transform_2, window_bounds = array<i64: 8, 1>}, {transform_indices = @transform_3, window_bounds = array<i64: 1, 8, 128>}]} {
    %c0 = arith.constant 0 : index
    %c0_0 = arith.constant 0 : index
    %0 = vector.load %arg3[%c0, %c0_0] : memref<8x4xf32, #tpu.memory_space<vmem>>, vector<8x4xf32>
    %c0_1 = arith.constant 0 : index
    %c0_2 = arith.constant 0 : index
    %c0_3 = arith.constant 0 : index
    %1 = vector.load %arg2[%c0_1, %c0_2, %c0_3] : memref<1x4x128xf32, #tpu.memory_space<vmem>>, vector<1x4x128xf32>
    %2 = vector.shape_cast %1 : vector<1x4x128xf32> to vector<4x128xf32>
    %cst = arith.constant dense<0.000000e+00> : vector<8x128xf32>
    %3 = tpu.matmul %0, %2, %cst {dimension_numbers = #tpu.dot_dimension_numbers<[1], [0], [0], [1], [0, 0, 1, 1], [], []>} : vector<8x4xf32>, vector<4x128xf32>, vector<8x128xf32> -> vector<8x128xf32>
    %c0_4 = arith.constant 0 : index
    %c0_5 = arith.constant 0 : index
    %4 = vector.load %arg4[%c0_4, %c0_5] : memref<8x1xf32, #tpu.memory_space<vmem>>, vector<8x1xf32>
    %5 = vector.broadcast %4 : vector<8x1xf32> to vector<8x128xf32>
    %6 = arith.addf %3, %5 : vector<8x128xf32>
    %c0_6 = arith.constant 0 : index
    %c0_7 = arith.constant 0 : index
    %c0_8 = arith.constant 0 : index
    %7 = vector.load %arg5[%c0_6, %c0_7, %c0_8] : memref<1x8x128xf32, #tpu.memory_space<vmem>>, vector<1x8x128xf32>
    %8 = vector.shape_cast %7 : vector<1x8x128xf32> to vector<8x128xf32>
    %9 = vector.shape_cast %6 : vector<8x128xf32> to vector<1x8x128xf32>
    tpu.vector_store %arg5[%c0_6, %c0_7, %c0_8], %9 {strides = array<i32>} : memref<1x8x128xf32, #tpu.memory_space<vmem>>, vector<1x8x128xf32>,
    return
  }
  func.func @transform_0(%arg0: i32, %arg1: i32) -> (i32, i32, i32) {
    %c0_i32 = arith.constant 0 : i32
    %c0_i32_0 = arith.constant 0 : i32
    return %arg0, %c0_i32, %arg1 : i32, i32, i32
  }
  func.func @transform_1(%arg0: i32, %arg1: i32) -> (i32, i32) {
    %c0_i32 = arith.constant 0 : i32
    %c0_i32_0 = arith.constant 0 : i32
    %c0_i32_1 = arith.constant 0 : i32
    return %c0_i32, %c0_i32_0 : i32, i32
  }
  func.func @transform_2(%arg0: i32, %arg1: i32) -> (i32, i32) {
    %c0_i32 = arith.constant 0 : i32
    %c0_i32_0 = arith.constant 0 : i32
    %c0_i32_1 = arith.constant 0 : i32
    return %c0_i32, %c0_i32_0 : i32, i32
  }
  func.func @transform_3(%arg0: i32, %arg1: i32) -> (i32, i32, i32) {
    %c0_i32 = arith.constant 0 : i32
    %c0_i32_0 = arith.constant 0 : i32
    return %arg0, %c0_i32, %arg1 : i32, i32, i32
  }
}

</mosaic_0001>

<llo_original>
// kernel: outconv_forward.1
$region0: #{outconv_forward.1}
  #allocation0 [shape = 'u32[]', space=smem, size = 0x4, offset = 0x4, fixed_abs, tag = 'smem constant byte address 0x4 - core index']
  #allocation1 [shape = 'u32[72,128]{1,0:T(1,128)}', space=vmem, size = 0x9000, scoped, tag = 'internal scratch']
  %s0 = inlined_call_operand.vmem [shape: f32[2,4,256], index: 0, kind: input, shape index: {}]
  %s1 = inlined_call_operand.vmem [shape: f32[8,4], index: 1, kind: input, shape index: {}]
  %s2 = inlined_call_operand.vmem [shape: f32[8,1], index: 2, kind: input, shape index: {}]
  %s3 = inlined_call_operand.vmem [shape: f32[2,8,256], index: 3, kind: output, shape index: {}]
  %s4 = sld [smem:[#allocation0]]
  $region45: #{outconv_forward.1} parent=0
    _
  %s6 = ssub.s32 1, %s4
  %s7 = scalar_select 0, %s6, %s4
  loop: start=0, step=1, limit=6
  $region2: #{outconv_forward.1} parent=0 // loop_pre_header
    _
  $region3: #{outconv_forward.1} parent=0 // loop_header
    %s9 = sphi 0, %s13
    %p10 = scmp.ge.s32.totalorder %s9, 6
    %s16 = sphi 0, %s28
    %s17 = sphi 0, %s24
    %s18 = sphi 0, %s16
    %s19 = sphi 0, %s17
    %s20 = sphi 0, %s18
    %s21 = sphi 0, %s19
    %s33 = sphi 0, %s35
    %s36 = sphi 0, %s33
    %s37 = sphi 0, %s36
    %s53 = sphi 0, %s37
    %s57 = sphi 0, %s57
    %s59 = sphi 0, %s57
    %s60 = sphi 0, %s59
    %s74 = sphi 0, %s60
    %s78 = sphi 0, %s78
    %s80 = sphi 0, %s78
    %s81 = sphi 0, %s80
    %s95 = sphi 0, %s81
    %s103 = sphi 0, %s105
    %s106 = sphi 0, %s103
    %s107 = sphi 0, %s106
    %s123 = sphi 0, %s107
  $region4: #{outconv_forward.1} parent=0 // loop_header_branch
    %12 = sbr.rel (%p10) target = $region8
  $region5: #{outconv_forward.1} parent=0 // loop_body
    %s14 = ssub.s32 %s9, 1
    %s15 = ssub.s32 %s9, 2
    %s22 = sadd.s32 1, %s17
    %p23 = scmp.ge.s32.totalorder %s22, 2
    %s24 = scalar_select %p23, 0, %s22
    %s25 = sadd.s32 1, %s16
    %s26 = scalar_select %p23, %s25, %s16
    %p27 = scmp.ge.s32.totalorder %s26, 2
    %s28 = scalar_select %p27, 0, %s26
    %s29 = ssub.s32 %s16, %s28
    %s30 = ssub.s32 %s17, %s24
    %s31 = sor.u32 %s29, %s30
    %p32 = scmp.eq.s32.totalorder %s31, 0
    %s34 = sadd.s32 %s33, 1
    %s35 = scalar_select %p32, %s33, %s34
    %p38 = pneg %p32
    %p39 = scmp.eq.s32.totalorder %s9, 3
    %p40 = por %p38, %p39
    %p41 = scmp.ne.s32.totalorder %s33, %s36
    %p42 = scmp.eq.s32.totalorder %s9, 0
    %p43 = por %p41, %p42
    %p44 = scmp.ne.s32.totalorder %s33, %s36
    %p45 = scmp.eq.s32.totalorder %s14, 3
    %p46 = por %p44, %p45
    %p47 = scmp.ne.s32.totalorder %s36, %s37
    %p48 = scmp.eq.s32.totalorder %s14, 0
    %p49 = por %p47, %p48
    %p50 = scmp.ne.s32.totalorder %s36, %s37
    %p51 = scmp.eq.s32.totalorder %s15, 3
    %p52 = por %p50, %p51
    %p54 = scmp.ne.s32.totalorder %s37, %s53
    %p55 = scmp.eq.s32.totalorder %s15, 0
    %p56 = por %p54, %p55
    %s58 = sadd.s32 %s57, 1
    %p61 = scmp.eq.s32.totalorder %s9, 3
    %p62 = scmp.ne.s32.totalorder %s57, %s59
    %p63 = scmp.eq.s32.totalorder %s9, 0
    %p64 = por %p62, %p63
    %p65 = scmp.ne.s32.totalorder %s57, %s59
    %p66 = scmp.eq.s32.totalorder %s14, 3
    %p67 = por %p65, %p66
    %p68 = scmp.ne.s32.totalorder %s59, %s60
    %p69 = scmp.eq.s32.totalorder %s14, 0
    %p70 = por %p68, %p69
    %p71 = scmp.ne.s32.totalorder %s59, %s60
    %p72 = scmp.eq.s32.totalorder %s15, 3
    %p73 = por %p71, %p72
    %p75 = scmp.ne.s32.totalorder %s60, %s74
    %p76 = scmp.eq.s32.totalorder %s15, 0
    %p77 = por %p75, %p76
    %s79 = sadd.s32 %s78, 1
    %p82 = scmp.eq.s32.totalorder %s9, 3
    %p83 = scmp.ne.s32.totalorder %s78, %s80
    %p84 = scmp.eq.s32.totalorder %s9, 0
    %p85 = por %p83, %p84
    %p86 = scmp.ne.s32.totalorder %s78, %s80
    %p87 = scmp.eq.s32.totalorder %s14, 3
    %p88 = por %p86, %p87
    %p89 = scmp.ne.s32.totalorder %s80, %s81
    %p90 = scmp.eq.s32.totalorder %s14, 0
    %p91 = por %p89, %p90
    %p92 = scmp.ne.s32.totalorder %s80, %s81
    %p93 = scmp.eq.s32.totalorder %s15, 3
    %p94 = por %p92, %p93
    %p96 = scmp.ne.s32.totalorder %s81, %s95
    %p97 = scmp.eq.s32.totalorder %s15, 0
    %p98 = por %p96, %p97
    %s99 = ssub.s32 %s16, %s28
    %s100 = ssub.s32 %s17, %s24
    %s101 = sor.u32 %s99, %s100
    %p102 = scmp.eq.s32.totalorder %s101, 0
    %s104 = sadd.s32 %s103, 1
    %s105 = scalar_select %p102, %s103, %s104
    %p108 = pneg %p102
    %p109 = scmp.eq.s32.totalorder %s9, 3
    %p110 = por %p108, %p109
    %p111 = scmp.ne.s32.totalorder %s103, %s106
    %p112 = scmp.eq.s32.totalorder %s9, 0
    %p113 = por %p111, %p112
    %p114 = scmp.ne.s32.totalorder %s103, %s106
    %p115 = scmp.eq.s32.totalorder %s14, 3
    %p116 = por %p114, %p115
    %p117 = scmp.ne.s32.totalorder %s106, %s107
    %p118 = scmp.eq.s32.totalorder %s14, 0
    %p119 = por %p117, %p118
    %p120 = scmp.ne.s32.totalorder %s106, %s107
    %p121 = scmp.eq.s32.totalorder %s15, 3
    %p122 = por %p120, %p121
    %p124 = scmp.ne.s32.totalorder %s107, %s123
    %p125 = scmp.eq.s32.totalorder %s15, 0
    %p126 = por %p124, %p125
    %p127 = scmp.le.s32.totalorder 1, %s9
    %p128 = scmp.lt.s32.totalorder %s9, 5
    %p129 = pnand %p127, %p128
    %p130 = pneg %p129
    // Predicated region
    $region9: #{outconv_forward.1} parent=5 // pred_check
      _
    $region10: #{outconv_forward.1} parent=5 // pred_check_branch
      %132 = sbr.rel (%p129) target = $region12
    $region11: #{outconv_forward.1} parent=5 // pred_region
      %s133 = ssub.s32 %s9, 1
      // Predicated region
      $region13: #{outconv_forward.1} parent=11 // pred_check
        %p134 = pneg %p70
      $region14: #{outconv_forward.1} parent=11 // pred_check_branch
        %136 = sbr.rel (%p134) target = $region16
      $region15: #{outconv_forward.1} parent=11 // pred_region
        _
      $region16: #{outconv_forward.1} parent=11 // pred_fallthru
        _
      // Predicated region
      $region17: #{outconv_forward.1} parent=11 // pred_check
        %p137 = pneg %p91
      $region18: #{outconv_forward.1} parent=11 // pred_check_branch
        %139 = sbr.rel (%p137) target = $region20
      $region19: #{outconv_forward.1} parent=11 // pred_region
        _
      $region20: #{outconv_forward.1} parent=11 // pred_fallthru
        _
    $region12: #{outconv_forward.1} parent=5 // pred_fallthru
      _
    %p140 = scmp.lt.s32.totalorder %s9, 4
    // Predicated region
    $region21: #{outconv_forward.1} parent=5 // pred_check
      %p141 = pneg %p140
    $region22: #{outconv_forward.1} parent=5 // pred_check_branch
      %143 = sbr.rel (%p141) target = $region24
    $region23: #{outconv_forward.1} parent=5 // pred_region
      // Predicated region
      $region25: #{outconv_forward.1} parent=23 // pred_check
        %p144 = pneg %p43
      $region26: #{outconv_forward.1} parent=23 // pred_check_branch
        %146 = sbr.rel (%p144) target = $region28
      $region27: #{outconv_forward.1} parent=23 // pred_region
        %p147 = scmp.lt.s32.totalorder %s16, 1
        %s148 = scalar_select %p147, %s16, 1
        %p149 = scmp.lt.s32.totalorder %s17, 1
        %s150 = scalar_select %p149, %s17, 1
        %s151 = smul.addr %s148, 2
        %s152 = sadd.s32 %s150, %s151
        %s153 = smul.addr %s152, 4
        %s154 = scalar_lea.vmem %s0, %s153
      $region28: #{outconv_forward.1} parent=23 // pred_fallthru
        _
    $region24: #{outconv_forward.1} parent=5 // pred_fallthru
      _
    %p155 = scmp.le.s32.totalorder 1, %s9
    %p156 = scmp.lt.s32.totalorder %s9, 5
    %p157 = pnand %p155, %p156
    %p158 = pneg %p157
    // Predicated region
    $region29: #{outconv_forward.1} parent=5 // pred_check
      _
    $region30: #{outconv_forward.1} parent=5 // pred_check_branch
      %160 = sbr.rel (%p157) target = $region32
    $region31: #{outconv_forward.1} parent=5 // pred_region
      %s161 = ssub.s32 %s9, 1
      %p162 = scmp.lt.s32.totalorder %s18, 1
      %s163 = scalar_select %p162, %s18, 1
      %p164 = scmp.lt.s32.totalorder %s19, 1
      %s165 = scalar_select %p164, %s19, 1
      %s166 = smul.addr %s163, 2
      %s167 = sadd.s32 %s165, %s166
      %s168 = smul.addr %s167, 4
      %s169 = scalar_lea.vmem %s0, %s168
      %p170 = pneg %p49
      %p171 = pneg %p46
      %p172 = pneg %p70
      %p173 = pneg %p67
      %p174 = pneg %p91
      %p175 = pneg %p88
      %p176 = pneg %p119
      %p177 = pneg %p116
      %p178 = scmp.lt.s32.totalorder %s18, 1
      %s179 = scalar_select %p178, %s18, 1
      %p180 = scmp.lt.s32.totalorder %s19, 1
      %s181 = scalar_select %p180, %s19, 1
      %s182 = smul.addr %s179, 2
      %s183 = sadd.s32 %s181, %s182
      %s184 = smul.addr %s183, 8
      %s185 = scalar_lea.vmem %s3, %s184
      %p186 = scmp.lt.s32.totalorder %s18, 1
      %s187 = scalar_select %p186, %s18, 1
      %p188 = scmp.lt.s32.totalorder %s19, 1
      %s189 = scalar_select %p188, %s19, 1
      %s190 = smul.addr %s187, 2
      %s191 = sadd.s32 %s189, %s190
      %s192 = smul.addr %s191, 4
      %s193 = scalar_lea.vmem %s0, %s192
      %p194 = scmp.lt.s32.totalorder %s18, 1
      %s195 = scalar_select %p194, %s18, 1
      %p196 = scmp.lt.s32.totalorder %s19, 1
      %s197 = scalar_select %p196, %s19, 1
      %s198 = smul.addr %s195, 2
      %s199 = sadd.s32 %s197, %s198
      %s200 = smul.addr %s199, 8
      %s201 = scalar_lea.vmem %s3, %s200
      %v202 = vld [vmem:[%s1] sm:$0xff]
      %v203 = vld [vmem:[%s193] sm:$0xf]
      %v204 = vld [vmem:[%s2] sm:$0xff]
      %206 = vset.pattern.permute.xlu0 0
      %207 = vperm.xlu0 %206, %v204
      %v208 = vpop.permute.xlu0 %207
      %vm210 = vcmask 31744
      %v212 = vsel %vm210, %v202, 0
      %vm214 = vcmask 1043456
      %v216 = vsel %vm214, %v203, 0
      %218 = vmatpush.msra.mxu0 0.0
      %219 = vmatpush.msra.mxu0 0.0
      %220 = vmatpush.msra.mxu0 0.0
      %221 = vmatpush.msra.mxu0 0.0
      %222 = vmatpush.msra.mxu0 0.0
      %223 = vmatpush.msra.mxu0 0.0
      %224 = vmatpush.msra.mxu0 0.0
      %225 = vmatpush.msra.mxu0 0.0
      %226 = vmatpush.msra.mxu0 0.0
      %227 = vmatpush.msra.mxu0 0.0
      %228 = vmatpush.msra.mxu0 0.0
      %229 = vmatpush.msra.mxu0 0.0
      %230 = vmatpush.msra.mxu0 0.0
      %231 = vmatpush.msra.mxu0 0.0
      %232 = vmatpush.msra.mxu0 0.0
      %233 = vmatpush.msra.mxu0 %v216
      %234 = vmatmul.f32.gmra.mxu0 %v212
      %v235 = vpop.f32.mrf.mxu0
      %v236 = vadd.f32 %v208, %v235
      %237 = vdwg.mxu0
      %238 = vst [vmem:[%s201] sm:$0xff] %v236
      %p239 = scmp.lt.s32.totalorder %s18, 1
      %s240 = scalar_select %p239, %s18, 1
      %p241 = scmp.lt.s32.totalorder %s19, 1
      %s242 = scalar_select %p241, %s19, 1
      %s243 = smul.addr %s240, 2
      %s244 = sadd.s32 %s242, %s243
      %s245 = smul.addr %s244, 8
      %s246 = scalar_lea.vmem %s3, %s245
      // Predicated region
      $region33: #{outconv_forward.1} parent=31 // pred_check
        %p247 = pneg %p116
      $region34: #{outconv_forward.1} parent=31 // pred_check_branch
        %249 = sbr.rel (%p247) target = $region36
      $region35: #{outconv_forward.1} parent=31 // pred_region
        _
      $region36: #{outconv_forward.1} parent=31 // pred_fallthru
        _
    $region32: #{outconv_forward.1} parent=5 // pred_fallthru
      _
    %p250 = scmp.le.s32.totalorder 2, %s9
    // Predicated region
    $region37: #{outconv_forward.1} parent=5 // pred_check
      %p251 = pneg %p250
    $region38: #{outconv_forward.1} parent=5 // pred_check_branch
      %253 = sbr.rel (%p251) target = $region40
    $region39: #{outconv_forward.1} parent=5 // pred_region
      %s254 = ssub.s32 %s9, 2
      // Predicated region
      $region41: #{outconv_forward.1} parent=39 // pred_check
        %p255 = pneg %p122
      $region42: #{outconv_forward.1} parent=39 // pred_check_branch
        %257 = sbr.rel (%p255) target = $region44
      $region43: #{outconv_forward.1} parent=39 // pred_region
        %p258 = scmp.lt.s32.totalorder %s20, 1
        %s259 = scalar_select %p258, %s20, 1
        %p260 = scmp.lt.s32.totalorder %s21, 1
        %s261 = scalar_select %p260, %s21, 1
        %s262 = smul.addr %s259, 2
        %s263 = sadd.s32 %s261, %s262
        %s264 = smul.addr %s263, 8
        %s265 = scalar_lea.vmem %s3, %s264
      $region44: #{outconv_forward.1} parent=39 // pred_fallthru
        _
    $region40: #{outconv_forward.1} parent=5 // pred_fallthru
      _
  $region6: #{outconv_forward.1} parent=0 // loop_footer
    %s13 = sadd.s32 1, %s9
  $region7: #{outconv_forward.1} parent=0 // loop_footer_branch
    %8 = sbr.rel target = $region3
  $region8: #{outconv_forward.1} parent=0 // loop_exit
    _

</llo_original>
